<compile_context>
chip_gen: v6e
topology: v6e:2x2x1
jax: 0.10.0
libtpu: 0.0.40
codegen_flags: <defaults>
</compile_context>

<pallas_src>
import functools

import jax
import jax.numpy as jnp
from jax import lax
from jax.experimental import pallas as pl
from jax.experimental.pallas import tpu as pltpu


_CHUNK = 128  # lane-chunk for the post-matmul stage (keeps the chain vreg-resident)


def _round_up(n, m):
    return ((n + m - 1) // m) * m


def _softplus_dtype():
    """bf16 transcendentals on v6e/v7x (bf16 EUP); f32 elsewhere (v5e & older)."""
    try:
        kind = jax.devices()[0].device_kind.lower()
    except Exception:
        return jnp.float32
    if any(tag in kind for tag in ("v6", "v7", "7x")):
        return jnp.bfloat16
    return jnp.float32


def _twolayer_kernel(xT_ref, w1_ref, w2_ref, b2_ref, o_ref, h_ref, *, chunk):
    # xT: [p, TM] bf16   w1: [H, p] bf16   w2: [H, 1] f32   b2: [1,1] f32 (SMEM)
    # o : [1, TM] f32    h (scratch): [H, TM] act-dtype (bf16 on v6e/v7x, else f32)
    H, TM = h_ref.shape

    # ---- layer 1 (no bias) on the MXU: [H, p] @ [p, TM] -> [H, TM], f32 acc.
    h_ref[...] = jnp.dot(
        w1_ref[...], xT_ref[...], preferred_element_type=jnp.float32
    ).astype(h_ref.dtype)

    # Hoisted once per grid step (JAX does not CSE broadcast_in_dim inside loops).
    w2b = jnp.broadcast_to(w2_ref[...], (H, chunk))            # [H, chunk] f32
    b2 = b2_ref[0, 0]

    # ---- post-matmul stage, chunked over 128 lanes so the softplus chain stays
    #      register-resident; EUP (exp + log1p) is the binding unit.
    def body(c, carry):
        start = pl.multiple_of(c * chunk, chunk)
        hc = h_ref[:, pl.ds(start, chunk)]                     # [H, chunk] act-dtype
        # softplus(x) = max(x, 0) + log1p(exp(-|x|))
        # (differs from torch's threshold-20 identity branch by < 2.1e-9)
        sp = jnp.maximum(hc, 0) + jnp.log1p(jnp.exp(-jnp.abs(hc)))
        # layer 2 (out_features = 1): VPU broadcast-multiply + sublane reduce (XLU),
        # accumulated in f32; padded hidden rows contribute 0 because w2_pad == 0.
        y = jnp.sum(sp.astype(jnp.float32) * w2b, axis=0, keepdims=True) + b2
        # softsign; approx reciprocal keeps the divide on the (free-ish) EUP slot.
        o_ref[:, pl.ds(start, chunk)] = y * pl.reciprocal(
            1.0 + jnp.abs(y), approx=True)
        return carry

    lax.fori_loop(0, TM // chunk, body, 0, unroll=True)


@functools.partial(jax.jit, static_argnames=("tm",))
def twolayer_forward(x, w1, w2, b2, *, tm=1024):
    """TwoLayer forward: softsign(Linear(softplus(Linear(x)))) fused in one kernel.

    x : [B, p] float32
    w1: [hidden, p]  (torch layer1.weight layout, no bias)
    w2: [1, hidden]  (torch layer2.weight layout)
    b2: [1]          (torch layer2.bias)
    returns [B, 1] float32 (~bf16-level accuracy; see header note).
    """
    B, p = x.shape
    hidden = w1.shape[0]
    H = _round_up(hidden, 8)                 # sublane-align hidden (100 -> 104)

    # ---- batch tiling: multiple of 128 lanes; >= 2 tiles when possible (v7x 2 TCs)
    B_r = _round_up(B, 128)
    TM = max(128, min(_round_up(tm, 128), B_r))
    if B_r >= 256:
        TM = min(TM, _round_up((B_r + 1) // 2, 128))
    B_pad = _round_up(B_r, TM)
    num_tiles = B_pad // TM

    act_dtype = _softplus_dtype()

    # ---- one-time layout prep (cheap XLA; bf16 so the extra pass over x is
    #      half-width, pad only the tail columns).
    xT = jnp.transpose(x.astype(jnp.bfloat16))                 # [p, B] bf16
    if B_pad > B:
        xT = jnp.pad(xT, ((0, 0), (0, B_pad - B)))
    w1_b = w1.astype(jnp.bfloat16)
    if H > hidden:
        w1_b = jnp.pad(w1_b, ((0, H - hidden), (0, 0)))
    w2_c = w2.reshape(hidden, 1).astype(jnp.float32)
    if H > hidden:
        w2_c = jnp.pad(w2_c, ((0, H - hidden), (0, 0)))        # padded rows -> 0
    b2_s = b2.reshape(1, 1).astype(jnp.float32)

    out = pl.pallas_call(
        functools.partial(_twolayer_kernel, chunk=_CHUNK),
        out_shape=jax.ShapeDtypeStruct((1, B_pad), jnp.float32),
        grid=(num_tiles,),
        in_specs=[
            # x^T tile streams along the batch (lane) axis; bf16 halves DMA bytes.
            pl.BlockSpec((p, TM), lambda i: (0, i)),
            # Weights: constant index maps -> VMEM-resident across grid steps.
            pl.BlockSpec((H, p), lambda i: (0, 0)),
            pl.BlockSpec((H, 1), lambda i: (0, 0)),
            # Scalar bias lives in SMEM (no per-step VMEM block).
            pl.BlockSpec(memory_space=pltpu.MemorySpace.SMEM),
        ],
        # Lane-dense output: each grid step writes a full [1, TM] row slab.
        out_specs=pl.BlockSpec((1, TM), lambda i: (0, i)),
        scratch_shapes=[pltpu.VMEM((H, TM), act_dtype)],
        compiler_params=pltpu.CompilerParams(
            dimension_semantics=("parallel",),  # shard tiles across TCs on v7x
        ),
    )(xT, w1_b, w2_c, b2_s)

    return out[0, :B].reshape(B, 1)


if __name__ == "__main__":
    p, hidden, batch = 10, 100, 8
    key = jax.random.PRNGKey(0)
    kx, k1, k2, k3 = jax.random.split(key, 4)

    x = jax.random.normal(kx, (batch, p), jnp.float32)

    # nn.Linear-style init: U(-1/sqrt(fan_in), 1/sqrt(fan_in)), torch layouts.
    bound1 = 1.0 / jnp.sqrt(jnp.float32(p))
    bound2 = 1.0 / jnp.sqrt(jnp.float32(hidden))
    w1 = jax.random.uniform(k1, (hidden, p), jnp.float32, -bound1, bound1)  # layer1.weight
    w2 = jax.random.uniform(k2, (1, hidden), jnp.float32, -bound2, bound2)  # layer2.weight
    b2 = jax.random.uniform(k3, (1,), jnp.float32, -bound2, bound2)         # layer2.bias

    out = twolayer_forward(x, w1, w2, b2)
    jax.block_until_ready(out)

    # Pure-JAX f32 reference of the PyTorch module.
    h_ref = jnp.logaddexp(x @ w1.T, 0.0)          # softplus(beta=1)
    y_ref = h_ref @ w2.T + b2
    ref = y_ref / (1.0 + jnp.abs(y_ref))          # softsign

    assert out.shape == (batch, 1)
    # bf16 layer-1 operands (+ bf16 softplus on v6e/v7x, approx reciprocal) ->
    # compare against the f32 reference with a correspondingly loose tolerance.
    assert jnp.allclose(out, ref, atol=2e-2, rtol=2e-2), (out, ref)

    print("KERNEL_OK")
</pallas_src>

<mosaic_0001>
module attributes {stable_mosaic.version = 11 : i64} {
  func.func @_twolayer_kernel(%arg0: i32, %arg1: memref<10x128xbf16, #tpu.memory_space<vmem>>, %arg2: memref<104x10xbf16, #tpu.memory_space<vmem>>, %arg3: memref<104x1xf32, #tpu.memory_space<vmem>>, %arg4: memref<1x1xf32, #tpu.memory_space<smem>>, %arg5: memref<1x128xf32, #tpu.memory_space<vmem>>, %arg6: memref<104x128xf32, #tpu.memory_space<vmem>>) attributes {dimension_semantics = [#tpu.dimension_semantics<parallel>], iteration_bounds = array<i64: 1>, scalar_prefetch = 0 : i64, scratch_operands = 1 : i64, tpu.core_type = #tpu.core_type<tc>, window_params = [{transform_indices = @transform_0, window_bounds = array<i64: 10, 128>}, {pipeline_mode = #tpu.pipeline_mode<synchronous>, transform_indices = @transform_1, window_bounds = array<i64: 104, 10>}, {pipeline_mode = #tpu.pipeline_mode<synchronous>, transform_indices = @transform_2, window_bounds = array<i64: 104, 1>}, {transform_indices = @transform_3, window_bounds = array<i64: 1, 1>}, {transform_indices = @transform_4, window_bounds = array<i64: 1, 128>}]} {
    %c0 = arith.constant 0 : index
    %c0_0 = arith.constant 0 : index
    %0 = vector.load %arg2[%c0, %c0_0] : memref<104x10xbf16, #tpu.memory_space<vmem>>, vector<104x10xbf16>
    %c0_1 = arith.constant 0 : index
    %c0_2 = arith.constant 0 : index
    %1 = vector.load %arg1[%c0_1, %c0_2] : memref<10x128xbf16, #tpu.memory_space<vmem>>, vector<10x128xbf16>
    %cst = arith.constant dense<0.000000e+00> : vector<104x128xf32>
    %2 = tpu.matmul %0, %1, %cst {dimension_numbers = #tpu.dot_dimension_numbers<[1], [0], [0], [1], [0, 0, 1, 1], [], []>} : vector<104x10xbf16>, vector<10x128xbf16>, vector<104x128xf32> -> vector<104x128xf32>
    %c0_3 = arith.constant 0 : index
    %c0_4 = arith.constant 0 : index
    %3 = vector.load %arg6[%c0_3, %c0_4] : memref<104x128xf32, #tpu.memory_space<vmem>>, vector<104x128xf32>
    tpu.vector_store %arg6[%c0_3, %c0_4], %2 {strides = array<i32>} : memref<104x128xf32, #tpu.memory_space<vmem>>, vector<104x128xf32>,
    %c0_5 = arith.constant 0 : index
    %c0_6 = arith.constant 0 : index
    %4 = vector.load %arg3[%c0_5, %c0_6] : memref<104x1xf32, #tpu.memory_space<vmem>>, vector<104x1xf32>
    %5 = vector.shape_cast %4 : vector<104x1xf32> to vector<104x1xf32>
    %6 = vector.broadcast %5 : vector<104x1xf32> to vector<104x128xf32>
    %c0_7 = arith.constant 0 : index
    %c0_8 = arith.constant 0 : index
    %7 = memref.load %arg4[%c0_7, %c0_8] : memref<1x1xf32, #tpu.memory_space<smem>>
    %c0_i32 = arith.constant 0 : i32
    %c128_i32 = arith.constant 128 : i32
    %8 = arith.muli %c0_i32, %c128_i32 : i32
    %9 = tpu.assume_multiple %8, 128 : i32
    %c0_9 = arith.constant 0 : index
    %10 = arith.index_cast %9 : i32 to index
    %11 = vector.load %arg6[%c0_9, %10] : memref<104x128xf32, #tpu.memory_space<vmem>>, vector<104x128xf32>
    %cst_10 = arith.constant 0.000000e+00 : f32
    %12 = vector.broadcast %cst_10 : f32 to vector<104x128xf32>
    %13 = arith.maximumf %11, %12 : vector<104x128xf32>
    %14 = math.absf %11 : vector<104x128xf32>
    %cst_11 = arith.constant 0.000000e+00 : f32
    %15 = vector.broadcast %cst_11 : f32 to vector<104x128xf32>
    %16 = arith.subf %15, %14 : vector<104x128xf32>
    %17 = math.exp %16 : vector<104x128xf32>
    %18 = math.log1p %17 : vector<104x128xf32>
    %19 = arith.addf %13, %18 : vector<104x128xf32>
    %20 = arith.mulf %19, %6 : vector<104x128xf32>
    %cst_12 = arith.constant dense<0.000000e+00> : vector<128xf32>
    %21 = vector.multi_reduction <add>, %20, %cst_12 [0] : vector<104x128xf32> to vector<128xf32>
    %22 = vector.shape_cast %21 : vector<128xf32> to vector<1x128xf32>
    %23 = vector.broadcast %7 : f32 to vector<1x128xf32>
    %24 = arith.addf %22, %23 : vector<1x128xf32>
    %25 = math.absf %24 : vector<1x128xf32>
    %cst_13 = arith.constant 1.000000e+00 : f32
    %26 = vector.broadcast %cst_13 : f32 to vector<1x128xf32>
    %27 = arith.addf %26, %25 : vector<1x128xf32>
    %28 = tpu.reciprocal %27 {approx = true} : vector<1x128xf32> -> vector<1x128xf32>
    %29 = arith.mulf %24, %28 : vector<1x128xf32>
    %c0_14 = arith.constant 0 : index
    %30 = arith.index_cast %9 : i32 to index
    %31 = vector.load %arg5[%c0_14, %30] : memref<1x128xf32, #tpu.memory_space<vmem>>, vector<1x128xf32>
    tpu.vector_store %arg5[%c0_14, %30], %29 {strides = array<i32>} : memref<1x128xf32, #tpu.memory_space<vmem>>, vector<1x128xf32>,
    %c1_i32 = arith.constant 1 : i32
    return
  }
  func.func @transform_0(%arg0: i32) -> (i32, i32) {
    %c0_i32 = arith.constant 0 : i32
    %c0_i32_0 = arith.constant 0 : i32
    return %c0_i32, %arg0 : i32, i32
  }
  func.func @transform_1(%arg0: i32) -> (i32, i32) {
    %c0_i32 = arith.constant 0 : i32
    %c0_i32_0 = arith.constant 0 : i32
    %c0_i32_1 = arith.constant 0 : i32
    return %c0_i32, %c0_i32_0 : i32, i32
  }
  func.func @transform_2(%arg0: i32) -> (i32, i32) {
    %c0_i32 = arith.constant 0 : i32
    %c0_i32_0 = arith.constant 0 : i32
    %c0_i32_1 = arith.constant 0 : i32
    return %c0_i32, %c0_i32_0 : i32, i32
  }
  func.func @transform_3(%arg0: i32) -> (i32, i32) {
    %c0_i32 = arith.constant 0 : i32
    %c0_i32_0 = arith.constant 0 : i32
    %c0_i32_1 = arith.constant 0 : i32
    return %c0_i32, %c0_i32_0 : i32, i32
  }
  func.func @transform_4(%arg0: i32) -> (i32, i32) {
    %c0_i32 = arith.constant 0 : i32
    %c0_i32_0 = arith.constant 0 : i32
    return %c0_i32, %arg0 : i32, i32
  }
}

</mosaic_0001>

<llo_original>
// kernel: twolayer_forward.1
$region0: #{twolayer_forward.1}
  #allocation0 [shape = 'u32[]', space=smem, size = 0x4, offset = 0x4, fixed_abs, tag = 'smem constant byte address 0x4 - core index']
  #allocation1 [shape = 'u32[144,128]{1,0:T(1,128)}', space=vmem, size = 0x12000, scoped, tag = 'internal scratch']
  #allocation2 [shape = 'f32[104,128]{1,0:T(8,128)}', space=vmem, size = 0xd000, scoped, tag = 'scratch operand']
  #allocation3 [shape = 'f32[1,1]{1,0:T(1,128)S(6)}', space=smem, size = 0x200, scoped, tag = 'scoped memory for twolayer_forward.1']
  %s0 = inlined_call_operand.vmem [shape: bf16[10,128], index: 0, kind: input, shape index: {}]
  %s1 = inlined_call_operand.vmem [shape: bf16[104,10], index: 1, kind: input, shape index: {}]
  %s2 = inlined_call_operand.vmem [shape: f32[104,1], index: 2, kind: input, shape index: {}]
  %s3 = inlined_call_operand.<no memory space> [shape: f32[1,1], index: 3, kind: input, shape index: {}]
  %s4 = inlined_call_operand.vmem [shape: f32[1,128], index: 4, kind: output, shape index: {}]
  %s5 = sld [smem:[#allocation0]]
  $region26: #{twolayer_forward.1} parent=0
    _
  %s7 = ssub.s32 1, %s5
  %s8 = scalar_select 0, %s7, %s5
  %9 = sst [smem:[#allocation3]] %s3
  // Predicated region
  $region2: #{twolayer_forward.1} parent=0 // pred_check
    _
  $region3: #{twolayer_forward.1} parent=0 // pred_check_branch
    %11 = sbr.rel (0) target = $region5
  $region4: #{twolayer_forward.1} parent=0 // pred_region
    _
  $region5: #{twolayer_forward.1} parent=0 // pred_fallthru
    _
  // Predicated region
  $region6: #{twolayer_forward.1} parent=0 // pred_check
    _
  $region7: #{twolayer_forward.1} parent=0 // pred_check_branch
    %13 = sbr.rel (0) target = $region9
  $region8: #{twolayer_forward.1} parent=0 // pred_region
    _
  $region9: #{twolayer_forward.1} parent=0 // pred_fallthru
    _
  // Predicated region
  $region10: #{twolayer_forward.1} parent=0 // pred_check
    _
  $region11: #{twolayer_forward.1} parent=0 // pred_check_branch
    %15 = sbr.rel (0) target = $region13
  $region12: #{twolayer_forward.1} parent=0 // pred_region
    _
  $region13: #{twolayer_forward.1} parent=0 // pred_fallthru
    _
  // Predicated region
  $region14: #{twolayer_forward.1} parent=0 // pred_check
    _
  $region15: #{twolayer_forward.1} parent=0 // pred_check_branch
    %17 = sbr.rel (0) target = $region17
  $region16: #{twolayer_forward.1} parent=0 // pred_region
    _
  $region17: #{twolayer_forward.1} parent=0 // pred_fallthru
    _
  %v19 = vld [vmem:[%s1] sm:$0xf]
  %v20 = vld [vmem:[%s1 + $0x4] sm:$0xf]
  %v21 = vld [vmem:[%s1 + $0x8] sm:$0xf]
  %v22 = vld [vmem:[%s1 + $0xc] sm:$0xf]
  %v23 = vld [vmem:[%s1 + $0x10] sm:$0xf]
  %v24 = vld [vmem:[%s1 + $0x14] sm:$0xf]
  %v25 = vld [vmem:[%s1 + $0x18] sm:$0xf]
  %v26 = vld [vmem:[%s1 + $0x1c] sm:$0xf]
  %v27 = vld [vmem:[%s1 + $0x20] sm:$0xf]
  %v28 = vld [vmem:[%s1 + $0x24] sm:$0xf]
  %v29 = vld [vmem:[%s1 + $0x28] sm:$0xf]
  %v30 = vld [vmem:[%s1 + $0x2c] sm:$0xf]
  %v31 = vld [vmem:[%s1 + $0x30] sm:$0xf]
  %v32 = vld [vmem:[%s0] sm:$0xf]
  %v33 = vld [vmem:[%s0 + $0x4] sm:$0x1]
  %v47 = vunpack.c.l.b16 %v19
  %v48 = vunpack.c.l.b16 %v20
  %v49 = vunpack.c.l.b16 %v21
  %v50 = vunpack.c.l.b16 %v22
  %v51 = vunpack.c.l.b16 %v23
  %v52 = vunpack.c.l.b16 %v24
  %v53 = vunpack.c.l.b16 %v25
  %v54 = vunpack.c.l.b16 %v26
  %v55 = vunpack.c.l.b16 %v27
  %v56 = vunpack.c.l.b16 %v28
  %v57 = vunpack.c.l.b16 %v29
  %v58 = vunpack.c.l.b16 %v30
  %v59 = vunpack.c.l.b16 %v31
  %v60 = vpack.c.b16 %v48, %v47
  %v61 = vpack.c.b16 %v50, %v49
  %v62 = vpack.c.b16 %v52, %v51
  %v63 = vpack.c.b16 %v54, %v53
  %v64 = vpack.c.b16 %v56, %v55
  %v65 = vpack.c.b16 %v58, %v57
  %v66 = vpack.c.b16 %v59, %v59
  %v69 = vunpack.c.l.b16 %v32
  %v70 = vunpack.c.l.b16 %v33
  %v71 = vpack.c.b16 %v70, %v69
  %vm72 = vcmask 80896
  %v74 = vsel %vm72, %v60, 0
  %v77 = vsel %vm72, %v61, 0
  %v80 = vsel %vm72, %v62, 0
  %v83 = vsel %vm72, %v63, 0
  %v86 = vsel %vm72, %v64, 0
  %v89 = vsel %vm72, %v65, 0
  %v92 = vsel %vm72, %v66, 0
  %vm94 = vcmask 1044480
  %v96 = vsel %vm94, %v71, 0
  %98 = vmatprep.subr.bf16.mxu0 0
  %99 = vmatpush1.bf16.msra.mxu0 0
  %100 = vmatprep.subr.bf16.mxu0 0
  %101 = vmatpush1.bf16.msra.mxu0 0
  %102 = vmatprep.subr.bf16.mxu0 0
  %103 = vmatpush1.bf16.msra.mxu0 0
  %104 = vmatprep.subr.bf16.mxu0 0
  %105 = vmatpush1.bf16.msra.mxu0 0
  %106 = vmatprep.subr.bf16.mxu0 0
  %107 = vmatpush1.bf16.msra.mxu0 0
  %108 = vmatprep.subr.bf16.mxu0 0
  %109 = vmatpush1.bf16.msra.mxu0 0
  %110 = vmatprep.subr.bf16.mxu0 0
  %111 = vmatpush1.bf16.msra.mxu0 0
  %112 = vmatprep.subr.bf16.mxu0 0
  %113 = vmatpush1.bf16.msra.mxu0 %v96
  %114 = vmatprep.subr.bf16.mxu0 0
  %115 = vmatpush2.bf16.msra.mxu0 0
  %116 = vmatprep.subr.bf16.mxu0 0
  %117 = vmatpush2.bf16.msra.mxu0 0
  %118 = vmatprep.subr.bf16.mxu0 0
  %119 = vmatpush2.bf16.msra.mxu0 0
  %120 = vmatprep.subr.bf16.mxu0 0
  %121 = vmatpush2.bf16.msra.mxu0 0
  %122 = vmatprep.subr.bf16.mxu0 0
  %123 = vmatpush2.bf16.msra.mxu0 0
  %124 = vmatprep.subr.bf16.mxu0 0
  %125 = vmatpush2.bf16.msra.mxu0 0
  %126 = vmatprep.subr.bf16.mxu0 0
  %127 = vmatpush2.bf16.msra.mxu0 0
  %128 = vmatprep.subr.bf16.mxu0 0
  %129 = vmatpush2.bf16.msra.mxu0 0
  %130 = vmatprep.mubr.bf16.mxu0 0
  %131 = vmatmul.mubr.bf16.gmra.mxu0 %v74
  %v132 = vpop.f32.mrf.mxu0
  %v133 = vadd.f32 0.0, %v132
  %v134 = vpop.f32.mrf.mxu0
  %v135 = vpop.f32.mrf.mxu0
  %v136 = vadd.f32 0.0, %v135
  %v137 = vpop.f32.mrf.mxu0
  %138 = vmatprep.mubr.bf16.mxu0 0
  %139 = vmatmul.mubr.bf16.gmra.mxu0 %v77
  %v140 = vpop.f32.mrf.mxu0
  %v141 = vadd.f32 0.0, %v140
  %v142 = vpop.f32.mrf.mxu0
  %v143 = vpop.f32.mrf.mxu0
  %v144 = vadd.f32 0.0, %v143
  %v145 = vpop.f32.mrf.mxu0
  %146 = vmatprep.mubr.bf16.mxu0 0
  %147 = vmatmul.mubr.bf16.gmra.mxu0 %v80
  %v148 = vpop.f32.mrf.mxu0
  %v149 = vadd.f32 0.0, %v148
  %v150 = vpop.f32.mrf.mxu0
  %v151 = vpop.f32.mrf.mxu0
  %v152 = vadd.f32 0.0, %v151
  %v153 = vpop.f32.mrf.mxu0
  %154 = vmatprep.mubr.bf16.mxu0 0
  %155 = vmatmul.mubr.bf16.gmra.mxu0 %v83
  %v156 = vpop.f32.mrf.mxu0
  %v157 = vadd.f32 0.0, %v156
  %v158 = vpop.f32.mrf.mxu0
  %v159 = vpop.f32.mrf.mxu0
  %v160 = vadd.f32 0.0, %v159
  %v161 = vpop.f32.mrf.mxu0
  %162 = vmatprep.mubr.bf16.mxu0 0
  %163 = vmatmul.mubr.bf16.gmra.mxu0 %v86
  %v164 = vpop.f32.mrf.mxu0
  %v165 = vadd.f32 0.0, %v164
  %v166 = vpop.f32.mrf.mxu0
  %v167 = vpop.f32.mrf.mxu0
  %v168 = vadd.f32 0.0, %v167
  %v169 = vpop.f32.mrf.mxu0
  %170 = vmatprep.mubr.bf16.mxu0 0
  %171 = vmatmul.mubr.bf16.gmra.mxu0 %v89
  %v172 = vpop.f32.mrf.mxu0
  %v173 = vadd.f32 0.0, %v172
  %v174 = vpop.f32.mrf.mxu0
  %v175 = vpop.f32.mrf.mxu0
  %v176 = vadd.f32 0.0, %v175
  %v177 = vpop.f32.mrf.mxu0
  %178 = vmatprep.mubr.bf16.mxu0 0
  %179 = vmatmul.mubr.bf16.gmra.mxu0 %v92
  %v180 = vpop.f32.mrf.mxu0
  %v181 = vadd.f32 0.0, %v180
  %v182 = vpop.f32.mrf.mxu0
  %v183 = vpop.f32.mrf.mxu0
  %v184 = vpop.f32.mrf.mxu0
  %185 = vdwg.mxu0
  %186 = vst [vmem:[#allocation2] sm:$0xff] %v133
  %187 = vst [vmem:[#allocation2 + $0x8] sm:$0xff] %v136
  %188 = vst [vmem:[#allocation2 + $0x10] sm:$0xff] %v141
  %189 = vst [vmem:[#allocation2 + $0x18] sm:$0xff] %v144
  %190 = vst [vmem:[#allocation2 + $0x20] sm:$0xff] %v149
  %191 = vst [vmem:[#allocation2 + $0x28] sm:$0xff] %v152
  %192 = vst [vmem:[#allocation2 + $0x30] sm:$0xff] %v157
  %193 = vst [vmem:[#allocation2 + $0x38] sm:$0xff] %v160
  %194 = vst [vmem:[#allocation2 + $0x40] sm:$0xff] %v165
  %195 = vst [vmem:[#allocation2 + $0x48] sm:$0xff] %v168
  %196 = vst [vmem:[#allocation2 + $0x50] sm:$0xff] %v173
  %197 = vst [vmem:[#allocation2 + $0x58] sm:$0xff] %v176
  %198 = vst [vmem:[#allocation2 + $0x60] sm:$0xff] %v181
  %v199 = vld [vmem:[%s2] sm:$0xff]
  %v200 = vld [vmem:[%s2 + $0x8] sm:$0xff]
  %v201 = vld [vmem:[%s2 + $0x10] sm:$0xff]
  %v202 = vld [vmem:[%s2 + $0x18] sm:$0xff]
  %v203 = vld [vmem:[%s2 + $0x20] sm:$0xff]
  %v204 = vld [vmem:[%s2 + $0x28] sm:$0xff]
  %v205 = vld [vmem:[%s2 + $0x30] sm:$0xff]
  %v206 = vld [vmem:[%s2 + $0x38] sm:$0xff]
  %v207 = vld [vmem:[%s2 + $0x40] sm:$0xff]
  %v208 = vld [vmem:[%s2 + $0x48] sm:$0xff]
  %v209 = vld [vmem:[%s2 + $0x50] sm:$0xff]
  %v210 = vld [vmem:[%s2 + $0x58] sm:$0xff]
  %v211 = vld [vmem:[%s2 + $0x60] sm:$0xff]
  %213 = vset.pattern.permute.xlu0 0
  %214 = vperm.xlu0 %213, %v199
  %v215 = vpop.permute.xlu0 %214
  %218 = vset.pattern.permute.xlu0 0
  %219 = vperm.xlu0 %218, %v200
  %v220 = vpop.permute.xlu0 %219
  %223 = vset.pattern.permute.xlu0 0
  %224 = vperm.xlu0 %223, %v201
  %v225 = vpop.permute.xlu0 %224
  %228 = vset.pattern.permute.xlu0 0
  %229 = vperm.xlu0 %228, %v202
  %v230 = vpop.permute.xlu0 %229
  %233 = vset.pattern.permute.xlu0 0
  %234 = vperm.xlu0 %233, %v203
  %v235 = vpop.permute.xlu0 %234
  %238 = vset.pattern.permute.xlu0 0
  %239 = vperm.xlu0 %238, %v204
  %v240 = vpop.permute.xlu0 %239
  %243 = vset.pattern.permute.xlu0 0
  %244 = vperm.xlu0 %243, %v205
  %v245 = vpop.permute.xlu0 %244
  %248 = vset.pattern.permute.xlu0 0
  %249 = vperm.xlu0 %248, %v206
  %v250 = vpop.permute.xlu0 %249
  %253 = vset.pattern.permute.xlu0 0
  %254 = vperm.xlu0 %253, %v207
  %v255 = vpop.permute.xlu0 %254
  %258 = vset.pattern.permute.xlu0 0
  %259 = vperm.xlu0 %258, %v208
  %v260 = vpop.permute.xlu0 %259
  %263 = vset.pattern.permute.xlu0 0
  %264 = vperm.xlu0 %263, %v209
  %v265 = vpop.permute.xlu0 %264
  %268 = vset.pattern.permute.xlu0 0
  %269 = vperm.xlu0 %268, %v210
  %v270 = vpop.permute.xlu0 %269
  %273 = vset.pattern.permute.xlu0 0
  %274 = vperm.xlu0 %273, %v211
  %v275 = vpop.permute.xlu0 %274
  %s277 = sld [smem:[#allocation3]]
  %v278 = vld [vmem:[#allocation2] sm:$0xff]
  %v279 = vld [vmem:[#allocation2 + $0x8] sm:$0xff]
  %v280 = vld [vmem:[#allocation2 + $0x10] sm:$0xff]
  %v281 = vld [vmem:[#allocation2 + $0x18] sm:$0xff]
  %v282 = vld [vmem:[#allocation2 + $0x20] sm:$0xff]
  %v283 = vld [vmem:[#allocation2 + $0x28] sm:$0xff]
  %v284 = vld [vmem:[#allocation2 + $0x30] sm:$0xff]
  %v285 = vld [vmem:[#allocation2 + $0x38] sm:$0xff]
  %v286 = vld [vmem:[#allocation2 + $0x40] sm:$0xff]
  %v287 = vld [vmem:[#allocation2 + $0x48] sm:$0xff]
  %v288 = vld [vmem:[#allocation2 + $0x50] sm:$0xff]
  %v289 = vld [vmem:[#allocation2 + $0x58] sm:$0xff]
  %v290 = vld [vmem:[#allocation2 + $0x60] sm:$0xff]
  %v291 = vmax.f32 %v278, 0.0
  %v292 = vmax.f32 %v279, 0.0
  %v293 = vmax.f32 %v280, 0.0
  %v294 = vmax.f32 %v281, 0.0
  %v295 = vmax.f32 %v282, 0.0
  %v296 = vmax.f32 %v283, 0.0
  %v297 = vmax.f32 %v284, 0.0
  %v298 = vmax.f32 %v285, 0.0
  %v299 = vmax.f32 %v286, 0.0
  %v300 = vmax.f32 %v287, 0.0
  %v301 = vmax.f32 %v288, 0.0
  %v302 = vmax.f32 %v289, 0.0
  %v303 = vmax.f32 %v290, 0.0
  %v304 = vand.u32 2147483647, %v278
  %v305 = vand.u32 2147483647, %v279
  %v306 = vand.u32 2147483647, %v280
  %v307 = vand.u32 2147483647, %v281
  %v308 = vand.u32 2147483647, %v282
  %v309 = vand.u32 2147483647, %v283
  %v310 = vand.u32 2147483647, %v284
  %v311 = vand.u32 2147483647, %v285
  %v312 = vand.u32 2147483647, %v286
  %v313 = vand.u32 2147483647, %v287
  %v314 = vand.u32 2147483647, %v288
  %v315 = vand.u32 2147483647, %v289
  %v316 = vand.u32 2147483647, %v290
  %v317 = vsub.f32 0.0, %v304
  %v318 = vsub.f32 0.0, %v305
  %v319 = vsub.f32 0.0, %v306
  %v320 = vsub.f32 0.0, %v307
  %v321 = vsub.f32 0.0, %v308
  %v322 = vsub.f32 0.0, %v309
  %v323 = vsub.f32 0.0, %v310
  %v324 = vsub.f32 0.0, %v311
  %v325 = vsub.f32 0.0, %v312
  %v326 = vsub.f32 0.0, %v313
  %v327 = vsub.f32 0.0, %v314
  %v328 = vsub.f32 0.0, %v315
  %v329 = vsub.f32 0.0, %v316
  %v330 = vmul.f32 %v317, 1.442695
  %v331 = vpow.pop %v330
  %v332 = vmul.f32 %v318, 1.442695
  %v333 = vpow.pop %v332
  %v334 = vmul.f32 %v319, 1.442695
  %v335 = vpow.pop %v334
  %v336 = vmul.f32 %v320, 1.442695
  %v337 = vpow.pop %v336
  %v338 = vmul.f32 %v321, 1.442695
  %v339 = vpow.pop %v338
  %v340 = vmul.f32 %v322, 1.442695
  %v341 = vpow.pop %v340
  %v342 = vmul.f32 %v323, 1.442695
  %v343 = vpow.pop %v342
  %v344 = vmul.f32 %v324, 1.442695
  %v345 = vpow.pop %v344
  %v346 = vmul.f32 %v325, 1.442695
  %v347 = vpow.pop %v346
  %v348 = vmul.f32 %v326, 1.442695
  %v349 = vpow.pop %v348
  %v350 = vmul.f32 %v327, 1.442695
  %v351 = vpow.pop %v350
  %v352 = vmul.f32 %v328, 1.442695
  %v353 = vpow.pop %v352
  %v354 = vmul.f32 %v329, 1.442695
  %v355 = vpow.pop %v354
  %v356 = vadd.f32 %v331, 1.0
  %v357 = vlog2.pop %v356
  %v358 = vmul.f32 %v357, 0.6931472
  %v359 = vmul.f32 -0.5, %v331
  %v360 = vadd.f32 %v359, 1.0
  %v361 = vmul.f32 %v360, %v331
  %v362 = vand.u32 2147483647, %v331
  %vm363 = vcmp.lt.f32.partialorder %v362, 0.0004427343
  %v364 = vsel %vm363, %v361, %v358
  %v365 = vadd.f32 %v333, 1.0
  %v366 = vlog2.pop %v365
  %v367 = vmul.f32 %v366, 0.6931472
  %v368 = vmul.f32 -0.5, %v333
  %v369 = vadd.f32 %v368, 1.0
  %v370 = vmul.f32 %v369, %v333
  %v371 = vand.u32 2147483647, %v333
  %vm372 = vcmp.lt.f32.partialorder %v371, 0.0004427343
  %v373 = vsel %vm372, %v370, %v367
  %v374 = vadd.f32 %v335, 1.0
  %v375 = vlog2.pop %v374
  %v376 = vmul.f32 %v375, 0.6931472
  %v377 = vmul.f32 -0.5, %v335
  %v378 = vadd.f32 %v377, 1.0
  %v379 = vmul.f32 %v378, %v335
  %v380 = vand.u32 2147483647, %v335
  %vm381 = vcmp.lt.f32.partialorder %v380, 0.0004427343
  %v382 = vsel %vm381, %v379, %v376
  %v383 = vadd.f32 %v337, 1.0
  %v384 = vlog2.pop %v383
  %v385 = vmul.f32 %v384, 0.6931472
  %v386 = vmul.f32 -0.5, %v337
  %v387 = vadd.f32 %v386, 1.0
  %v388 = vmul.f32 %v387, %v337
  %v389 = vand.u32 2147483647, %v337
  %vm390 = vcmp.lt.f32.partialorder %v389, 0.0004427343
  %v391 = vsel %vm390, %v388, %v385
  %v392 = vadd.f32 %v339, 1.0
  %v393 = vlog2.pop %v392
  %v394 = vmul.f32 %v393, 0.6931472
  %v395 = vmul.f32 -0.5, %v339
  %v396 = vadd.f32 %v395, 1.0
  %v397 = vmul.f32 %v396, %v339
  %v398 = vand.u32 2147483647, %v339
  %vm399 = vcmp.lt.f32.partialorder %v398, 0.0004427343
  %v400 = vsel %vm399, %v397, %v394
  %v401 = vadd.f32 %v341, 1.0
  %v402 = vlog2.pop %v401
  %v403 = vmul.f32 %v402, 0.6931472
  %v404 = vmul.f32 -0.5, %v341
  %v405 = vadd.f32 %v404, 1.0
  %v406 = vmul.f32 %v405, %v341
  %v407 = vand.u32 2147483647, %v341
  %vm408 = vcmp.lt.f32.partialorder %v407, 0.0004427343
  %v409 = vsel %vm408, %v406, %v403
  %v410 = vadd.f32 %v343, 1.0
  %v411 = vlog2.pop %v410
  %v412 = vmul.f32 %v411, 0.6931472
  %v413 = vmul.f32 -0.5, %v343
  %v414 = vadd.f32 %v413, 1.0
  %v415 = vmul.f32 %v414, %v343
  %v416 = vand.u32 2147483647, %v343
  %vm417 = vcmp.lt.f32.partialorder %v416, 0.0004427343
  %v418 = vsel %vm417, %v415, %v412
  %v419 = vadd.f32 %v345, 1.0
  %v420 = vlog2.pop %v419
  %v421 = vmul.f32 %v420, 0.6931472
  %v422 = vmul.f32 -0.5, %v345
  %v423 = vadd.f32 %v422, 1.0
  %v424 = vmul.f32 %v423, %v345
  %v425 = vand.u32 2147483647, %v345
  %vm426 = vcmp.lt.f32.partialorder %v425, 0.0004427343
  %v427 = vsel %vm426, %v424, %v421
  %v428 = vadd.f32 %v347, 1.0
  %v429 = vlog2.pop %v428
  %v430 = vmul.f32 %v429, 0.6931472
  %v431 = vmul.f32 -0.5, %v347
  %v432 = vadd.f32 %v431, 1.0
  %v433 = vmul.f32 %v432, %v347
  %v434 = vand.u32 2147483647, %v347
  %vm435 = vcmp.lt.f32.partialorder %v434, 0.0004427343
  %v436 = vsel %vm435, %v433, %v430
  %v437 = vadd.f32 %v349, 1.0
  %v438 = vlog2.pop %v437
  %v439 = vmul.f32 %v438, 0.6931472
  %v440 = vmul.f32 -0.5, %v349
  %v441 = vadd.f32 %v440, 1.0
  %v442 = vmul.f32 %v441, %v349
  %v443 = vand.u32 2147483647, %v349
  %vm444 = vcmp.lt.f32.partialorder %v443, 0.0004427343
  %v445 = vsel %vm444, %v442, %v439
  %v446 = vadd.f32 %v351, 1.0
  %v447 = vlog2.pop %v446
  %v448 = vmul.f32 %v447, 0.6931472
  %v449 = vmul.f32 -0.5, %v351
  %v450 = vadd.f32 %v449, 1.0
  %v451 = vmul.f32 %v450, %v351
  %v452 = vand.u32 2147483647, %v351
  %vm453 = vcmp.lt.f32.partialorder %v452, 0.0004427343
  %v454 = vsel %vm453, %v451, %v448
  %v455 = vadd.f32 %v353, 1.0
  %v456 = vlog2.pop %v455
  %v457 = vmul.f32 %v456, 0.6931472
  %v458 = vmul.f32 -0.5, %v353
  %v459 = vadd.f32 %v458, 1.0
  %v460 = vmul.f32 %v459, %v353
  %v461 = vand.u32 2147483647, %v353
  %vm462 = vcmp.lt.f32.partialorder %v461, 0.0004427343
  %v463 = vsel %vm462, %v460, %v457
  %v464 = vadd.f32 %v355, 1.0
  %v465 = vlog2.pop %v464
  %v466 = vmul.f32 %v465, 0.6931472
  %v467 = vmul.f32 -0.5, %v355
  %v468 = vadd.f32 %v467, 1.0
  %v469 = vmul.f32 %v468, %v355
  %v470 = vand.u32 2147483647, %v355
  %vm471 = vcmp.lt.f32.partialorder %v470, 0.0004427343
  %v472 = vsel %vm471, %v469, %v466
  %v473 = vadd.f32 %v291, %v364
  %v474 = vadd.f32 %v292, %v373
  %v475 = vadd.f32 %v293, %v382
  %v476 = vadd.f32 %v294, %v391
  %v477 = vadd.f32 %v295, %v400
  %v478 = vadd.f32 %v296, %v409
  %v479 = vadd.f32 %v297, %v418
  %v480 = vadd.f32 %v298, %v427
  %v481 = vadd.f32 %v299, %v436
  %v482 = vadd.f32 %v300, %v445
  %v483 = vadd.f32 %v301, %v454
  %v484 = vadd.f32 %v302, %v463
  %v485 = vadd.f32 %v303, %v472
  %v486 = vmul.f32 %v473, %v215
  %v487 = vmul.f32 %v474, %v220
  %v488 = vmul.f32 %v475, %v225
  %v489 = vmul.f32 %v476, %v230
  %v490 = vmul.f32 %v477, %v235
  %v491 = vmul.f32 %v478, %v240
  %v492 = vmul.f32 %v479, %v245
  %v493 = vmul.f32 %v480, %v250
  %v494 = vmul.f32 %v481, %v255
  %v495 = vmul.f32 %v482, %v260
  %v496 = vmul.f32 %v483, %v265
  %v497 = vmul.f32 %v484, %v270
  %v498 = vmul.f32 %v485, %v275
  %v499 = vadd.f32 %v486, %v487
  %v500 = vadd.f32 %v499, %v488
  %v501 = vadd.f32 %v500, %v489
  %v502 = vadd.f32 %v501, %v490
  %v503 = vadd.f32 %v502, %v491
  %v504 = vadd.f32 %v503, %v492
  %v505 = vadd.f32 %v504, %v493
  %v506 = vadd.f32 %v505, %v494
  %v507 = vadd.f32 %v506, %v495
  %v508 = vadd.f32 %v507, %v496
  %v509 = vadd.f32 %v508, %v497
  %v510 = vadd.f32 %v509, %v498
  %v511 = vrot.slane %v510, 4
  %v512 = vadd.f32 %v510, %v511
  %v513 = vrot.slane %v512, 2
  %v514 = vadd.f32 %v512, %v513
  %v515 = vrot.slane %v514, 1
  %v516 = vadd.f32 %v514, %v515
  %v517 = vstv %s277
  %v518 = vadd.f32 %v516, %v517
  %v519 = vand.u32 2147483647, %v518
  %v520 = vadd.f32 %v519, 1.0
  %v521 = vrcp.pop %v520
  %v522 = vmul.f32 %v518, %v521
  %523 = vst [vmem:[%s4] sm:$0x1] %v522
  // Predicated region
  $region18: #{twolayer_forward.1} parent=0 // pred_check
    _
  $region19: #{twolayer_forward.1} parent=0 // pred_check_branch
    %525 = sbr.rel (0) target = $region21
  $region20: #{twolayer_forward.1} parent=0 // pred_region
    _
  $region21: #{twolayer_forward.1} parent=0 // pred_fallthru
    _
  // Predicated region
  $region22: #{twolayer_forward.1} parent=0 // pred_check
    _
  $region23: #{twolayer_forward.1} parent=0 // pred_check_branch
    %527 = sbr.rel (0) target = $region25
  $region24: #{twolayer_forward.1} parent=0 // pred_region
    _
  $region25: #{twolayer_forward.1} parent=0 // pred_fallthru
    _

</llo_original>
